<compile_context>
chip_gen: v6e
topology: v6e:2x2x1
jax: 0.10.0
libtpu: 0.0.40
codegen_flags: <defaults>
</compile_context>

<pallas_src>
import functools

import jax
import jax.numpy as jnp
import numpy as np
from jax import lax
from jax.experimental import pallas as pl
from jax.experimental.pallas import tpu as pltpu


def _sepconv_kernel(x_ref, w_ref, b_ref, o_ref, xw_ref, xt_ref, *,
                    C, F, Fo, Lt, pad_lo, pad_hi, shifts, do_carry):
    """One (batch, time-tile) step of the folded separable conv.

    x_ref : [1, C, Lt]              current time tile, flattened (Tt, F), lane-dense
    w_ref : [O, KT*KF*C]            folded (pointwise . depthwise) weights
    b_ref : [O, 1]                  folded bias (f32)
    o_ref : [1, O, Lt]              flattened output tile
    xw_ref: [C, >= pad_lo+Lt+pad_hi] working plane: [time halo | current tile | freq tail]
    xt_ref: [KT*KF*C, Lt]           stacked shifted tap views (single MXU operand)
    """
    k = pl.program_id(1)
    x_cur = x_ref[0]                                        # [C, Lt]

    if pad_lo + pad_hi > 0:
        @pl.when(k == 0)
        def _():
            # Causal zero padding (time halo) + zero freq-overrun tail, once per batch
            # element.  The middle region is overwritten below.
            xw_ref[...] = jnp.zeros_like(xw_ref)

    xw_ref[:, pad_lo:pad_lo + Lt] = x_cur

    # Stack the KT*KF shifted tap views into one [KT*KF*C, Lt] operand so depthwise +
    # pointwise collapse into a single MXU contraction of depth KT*KF*C.
    for idx, s in enumerate(shifts):
        xt_ref[idx * C:(idx + 1) * C, :] = xw_ref[:, s:s + Lt]

    y = jnp.dot(w_ref[...], xt_ref[...], preferred_element_type=jnp.float32)   # [O, Lt]
    y = y + b_ref[...]

    if Fo < F:
        # Zero the df*(KF-1) scrap frequency columns so the untrimmed output slab is
        # well defined (the wrapper slices them away).
        col = lax.broadcasted_iota(jnp.int32, y.shape, 1)
        y = jnp.where(col % F < Fo, y, 0.0)

    o_ref[0] = y.astype(o_ref.dtype)

    if do_carry:
        # Carry: the last `pad` input rows of this tile are the halo of the next time
        # tile of the same batch element (time axis is sequential / "arbitrary").
        xw_ref[:, :pad_lo] = x_cur[:, Lt - pad_lo:]


def _pick_time_block(T, F, pad, bytes_per_row, budget_bytes=4 << 20):
    """Largest divisor Tt of T with lane-dense blocks (Tt*F % 128 == 0), Tt >= pad (so a
    single previous tile supplies the halo) and in+out block bytes <= budget."""
    best = None
    for tt in range(1, T + 1):
        if T % tt:
            continue
        if tt != T and (tt < max(pad, 1) or (tt * F) % 128):
            continue
        if best is None or tt * bytes_per_row <= budget_bytes:
            best = tt
    return best


def sepconv_pallas(x, dconv_w, dconv_b, pconv_w, pconv_b,
                   kernel_size=(5, 2), dilation=(1, 1),
                   time_block=None, compute_dtype=None):
    """Pallas TPU implementation of SepConv.forward.

    x        : [B, C, T, F]
    dconv_w  : [C*filters, 1, KT, KF]   depthwise conv weight (groups=C)
    dconv_b  : [C*filters]
    pconv_w  : [O, C*filters, 1, 1]     pointwise 1x1 conv weight
    pconv_b  : [O]
    returns  : [B, O, T, F - dil_f*(KF-1)]
    """
    B, C, T, F = x.shape
    KT, KF = kernel_size
    dt, df = dilation
    CM = dconv_w.shape[0]
    M = CM // C
    O = pconv_w.shape[0]
    pad = dt * (KT - 1)
    Fo = F - df * (KF - 1)
    assert CM == C * M and Fo >= 1

    cdtype = jnp.dtype(compute_dtype) if compute_dtype is not None else jnp.dtype(x.dtype)
    itemsize = cdtype.itemsize

    # ---- fold depthwise into pointwise (tiny wrapper-side arrays) --------------------
    # cm = c*M + m (PyTorch grouped-conv channel order)
    wd = dconv_w[:, 0].reshape(C, M, KT, KF).astype(jnp.float32)
    wp = pconv_w[:, :, 0, 0].reshape(O, C, M).astype(jnp.float32)
    weff = jnp.einsum('ocm,cmij->ijoc', wp, wd)                       # [KT, KF, O, C]
    weff2d = (weff.reshape(KT * KF, O, C).transpose(1, 0, 2)
              .reshape(O, KT * KF * C)).astype(cdtype)                # [O, KT*KF*C]
    beff = (pconv_b.astype(jnp.float32)
            + jnp.einsum('ocm,cm->o', wp, dconv_b.reshape(C, M).astype(jnp.float32)))
    beff2d = beff.reshape(O, 1)                                       # [O, 1], f32

    # ---- time tiling ------------------------------------------------------------------
    if time_block is None:
        time_block = _pick_time_block(T, F, pad, (C + O) * F * itemsize)
    Tt = int(time_block)
    assert T % Tt == 0, "time_block must divide T"
    nT = T // Tt
    if nT > 1:
        assert Tt >= pad, "time_block must be >= causal padding for the halo carry"
        assert (Tt * F) % 128 == 0, "pick time_block so Tt*F is a multiple of 128"

    Lt = Tt * F
    pad_lo = pad * F                        # flattened time halo
    pad_hi = df * (KF - 1)                  # freq-tap overrun into the scrap columns
    KC = KT * KF * C
    shifts = tuple(i * dt * F + j * df for i in range(KT) for j in range(KF))
    w_alloc = (pad_lo + Lt + pad_hi + 127) // 128 * 128   # lane-rounded working width

    x_flat = x.reshape(B, C, T * F).astype(cdtype)        # lane-dense; reshape is free

    kernel = functools.partial(
        _sepconv_kernel, C=C, F=F, Fo=Fo, Lt=Lt, pad_lo=pad_lo, pad_hi=pad_hi,
        shifts=shifts, do_carry=(nT > 1 and pad_lo > 0))

    # Explicit VMEM budget: double-buffered in/out blocks + weights + scratch (+ slack).
    est = (2 * (C * Lt * itemsize + O * Lt * jnp.dtype(x.dtype).itemsize)
           + 2 * (weff2d.size * itemsize + beff2d.size * 4)
           + (C * w_alloc + KC * Lt) * itemsize)
    vmem_limit = int(min(64 << 20, max(32 << 20, 8 * est)))

    y_flat = pl.pallas_call(
        kernel,
        out_shape=jax.ShapeDtypeStruct((B, O, T * F), x.dtype),
        grid_spec=pltpu.PrefetchScalarGridSpec(
            num_scalar_prefetch=0,
            grid=(B, nT),
            in_specs=[
                pl.BlockSpec((1, C, Lt), lambda b, k: (b, 0, k)),
                pl.BlockSpec((O, KC), lambda b, k: (0, 0)),
                pl.BlockSpec((O, 1), lambda b, k: (0, 0)),
            ],
            out_specs=pl.BlockSpec((1, O, Lt), lambda b, k: (b, 0, k)),
            scratch_shapes=[
                pltpu.VMEM((C, w_alloc), cdtype),     # halo + current tile working plane
                pltpu.VMEM((KC, Lt), cdtype),         # stacked tap operand for the MXU
            ],
        ),
        compiler_params=pltpu.CompilerParams(
            dimension_semantics=("parallel", "arbitrary"),
            vmem_limit_bytes=vmem_limit,
        ),
    )(x_flat, weff2d, beff2d)

    # Back to [B, O, T, F]; trim the df*(KF-1) scrap frequency columns (zeroed in-kernel).
    # TODO(synk): a fused consumer could take the untrimmed [B, O, T, F] slab directly and
    # skip this extra HBM pass over the output.
    return y_flat.reshape(B, O, T, F)[..., :Fo]


def sepconv_reference(x, dconv_w, dconv_b, pconv_w, pconv_b,
                      kernel_size=(5, 2), dilation=(1, 1)):
    """Pure-JAX reference matching the PyTorch SepConv.forward semantics."""
    KT, _ = kernel_size
    dt, df = dilation
    C = x.shape[1]
    pad = dt * (KT - 1)
    xp = jnp.pad(x, ((0, 0), (0, 0), (pad, 0), (0, 0)))
    dn = ('NCHW', 'OIHW', 'NCHW')
    h = jax.lax.conv_general_dilated(xp, dconv_w, window_strides=(1, 1),
                                     padding='VALID', rhs_dilation=(dt, df),
                                     dimension_numbers=dn, feature_group_count=C)
    h = h + dconv_b[None, :, None, None]
    y = jax.lax.conv_general_dilated(h, pconv_w, window_strides=(1, 1),
                                     padding='VALID', dimension_numbers=dn)
    y = y + pconv_b[None, :, None, None]
    return y


if __name__ == "__main__":
    # SepConv(in_channels=4, filters=2, out_channels=6), kernel (5, 2), dilation (1, 1)
    B, C, T, F = 2, 4, 16, 16
    filters, O = 2, 6
    KT, KF = 5, 2
    dilation = (1, 1)
    CM = C * filters
    Fo = F - dilation[1] * (KF - 1)

    key = jax.random.PRNGKey(0)
    k_x, k_wd, k_bd, k_wp, k_bp = jax.random.split(key, 5)
    x = jax.random.normal(k_x, (B, C, T, F), jnp.float32)
    dconv_w = jax.random.normal(k_wd, (CM, 1, KT, KF), jnp.float32) * 0.1
    dconv_b = jax.random.normal(k_bd, (CM,), jnp.float32) * 0.1
    pconv_w = jax.random.normal(k_wp, (O, CM, 1, 1), jnp.float32) * 0.1
    pconv_b = jax.random.normal(k_bp, (O,), jnp.float32) * 0.1

    y_ref = sepconv_reference(x, dconv_w, dconv_b, pconv_w, pconv_b,
                              kernel_size=(KT, KF), dilation=dilation)

    # Time-tiled path: grid (B, T//8) = (2, 2); halo carried across time tiles.
    y_tiled = sepconv_pallas(x, dconv_w, dconv_b, pconv_w, pconv_b,
                             kernel_size=(KT, KF), dilation=dilation, time_block=8)
    y_tiled = jax.block_until_ready(y_tiled)
    np.testing.assert_allclose(np.asarray(y_tiled), np.asarray(y_ref),
                               rtol=1e-4, atol=1e-4)
    assert y_tiled.shape == (B, O, T, Fo)

    # Auto-picked time block (single tile per batch element at this tiny size).
    y_auto = sepconv_pallas(x, dconv_w, dconv_b, pconv_w, pconv_b,
                            kernel_size=(KT, KF), dilation=dilation)
    y_auto = jax.block_until_ready(y_auto)
    np.testing.assert_allclose(np.asarray(y_auto), np.asarray(y_ref),
                               rtol=1e-4, atol=1e-4)

    print("KERNEL_OK")
</pallas_src>

<mosaic_0001>
module attributes {stable_mosaic.version = 11 : i64} {
  func.func @_sepconv_kernel(%arg0: i32, %arg1: i32, %arg2: memref<1x4x128xf32, #tpu.memory_space<vmem>>, %arg3: memref<6x40xf32, #tpu.memory_space<vmem>>, %arg4: memref<6x1xf32, #tpu.memory_space<vmem>>, %arg5: memref<1x6x128xf32, #tpu.memory_space<vmem>>, %arg6: memref<4x256xf32, #tpu.memory_space<vmem>>, %arg7: memref<40x128xf32, #tpu.memory_space<vmem>>) attributes {dimension_semantics = [#tpu.dimension_semantics<parallel>, #tpu.dimension_semantics<arbitrary>], iteration_bounds = array<i64: 2, 2>, scalar_prefetch = 0 : i64, scratch_operands = 2 : i64, tpu.core_type = #tpu.core_type<tc>, window_params = [{transform_indices = @transform_0, window_bounds = array<i64: 1, 4, 128>}, {pipeline_mode = #tpu.pipeline_mode<synchronous>, transform_indices = @transform_1, window_bounds = array<i64: 6, 40>}, {pipeline_mode = #tpu.pipeline_mode<synchronous>, transform_indices = @transform_2, window_bounds = array<i64: 6, 1>}, {transform_indices = @transform_3, window_bounds = array<i64: 1, 6, 128>}]} {
    %c0 = arith.constant 0 : index
    %c0_0 = arith.constant 0 : index
    %c0_1 = arith.constant 0 : index
    %0 = vector.load %arg2[%c0, %c0_0, %c0_1] : memref<1x4x128xf32, #tpu.memory_space<vmem>>, vector<1x4x128xf32>
    %1 = vector.shape_cast %0 : vector<1x4x128xf32> to vector<4x128xf32>
    %c0_i32 = arith.constant 0 : i32
    %2 = arith.cmpi eq, %arg1, %c0_i32 : i32
    %3 = arith.extui %2 : i1 to i32
    %c0_i32_2 = arith.constant 0 : i32
    %4 = arith.cmpi ne, %3, %c0_i32_2 : i32
    scf.if %4 {
      %cst_45 = arith.constant 0.000000e+00 : f32
      %58 = vector.broadcast %cst_45 : f32 to vector<4x256xf32>
      %c0_46 = arith.constant 0 : index
      %c0_47 = arith.constant 0 : index
      %59 = vector.load %arg6[%c0_46, %c0_47] : memref<4x256xf32, #tpu.memory_space<vmem>>, vector<4x256xf32>
      tpu.vector_store %arg6[%c0_46, %c0_47], %58 {strides = array<i32>} : memref<4x256xf32, #tpu.memory_space<vmem>>, vector<4x256xf32>,
    } else {
    }
    %c0_3 = arith.constant 0 : index
    %c64 = arith.constant 64 : index
    %5 = vector.load %arg6[%c0_3, %c64] : memref<4x256xf32, #tpu.memory_space<vmem>>, vector<4x128xf32>
    tpu.vector_store %arg6[%c0_3, %c64], %1 {strides = array<i32>} : memref<4x256xf32, #tpu.memory_space<vmem>>, vector<4x128xf32>,
    %c0_4 = arith.constant 0 : index
    %c0_5 = arith.constant 0 : index
    %6 = vector.load %arg6[%c0_4, %c0_5] : memref<4x256xf32, #tpu.memory_space<vmem>>, vector<4x128xf32>
    %c0_6 = arith.constant 0 : index
    %c0_7 = arith.constant 0 : index
    %7 = vector.load %arg7[%c0_6, %c0_7] : memref<40x128xf32, #tpu.memory_space<vmem>>, vector<4x128xf32>
    tpu.vector_store %arg7[%c0_6, %c0_7], %6 {strides = array<i32>} : memref<40x128xf32, #tpu.memory_space<vmem>>, vector<4x128xf32>,
    %c0_8 = arith.constant 0 : index
    %c1 = arith.constant 1 : index
    %8 = vector.load %arg6[%c0_8, %c1] : memref<4x256xf32, #tpu.memory_space<vmem>>, vector<4x128xf32>
    %c4 = arith.constant 4 : index
    %c0_9 = arith.constant 0 : index
    %9 = vector.load %arg7[%c4, %c0_9] : memref<40x128xf32, #tpu.memory_space<vmem>>, vector<4x128xf32>
    tpu.vector_store %arg7[%c4, %c0_9], %8 {strides = array<i32>} : memref<40x128xf32, #tpu.memory_space<vmem>>, vector<4x128xf32>,
    %c0_10 = arith.constant 0 : index
    %c16 = arith.constant 16 : index
    %10 = vector.load %arg6[%c0_10, %c16] : memref<4x256xf32, #tpu.memory_space<vmem>>, vector<4x128xf32>
    %c8 = arith.constant 8 : index
    %c0_11 = arith.constant 0 : index
    %11 = vector.load %arg7[%c8, %c0_11] : memref<40x128xf32, #tpu.memory_space<vmem>>, vector<4x128xf32>
    tpu.vector_store %arg7[%c8, %c0_11], %10 {strides = array<i32>} : memref<40x128xf32, #tpu.memory_space<vmem>>, vector<4x128xf32>,
    %c0_12 = arith.constant 0 : index
    %c17 = arith.constant 17 : index
    %12 = vector.load %arg6[%c0_12, %c17] : memref<4x256xf32, #tpu.memory_space<vmem>>, vector<4x128xf32>
    %c12 = arith.constant 12 : index
    %c0_13 = arith.constant 0 : index
    %13 = vector.load %arg7[%c12, %c0_13] : memref<40x128xf32, #tpu.memory_space<vmem>>, vector<4x128xf32>
    tpu.vector_store %arg7[%c12, %c0_13], %12 {strides = array<i32>} : memref<40x128xf32, #tpu.memory_space<vmem>>, vector<4x128xf32>,
    %c0_14 = arith.constant 0 : index
    %c32 = arith.constant 32 : index
    %14 = vector.load %arg6[%c0_14, %c32] : memref<4x256xf32, #tpu.memory_space<vmem>>, vector<4x128xf32>
    %c16_15 = arith.constant 16 : index
    %c0_16 = arith.constant 0 : index
    %15 = vector.load %arg7[%c16_15, %c0_16] : memref<40x128xf32, #tpu.memory_space<vmem>>, vector<4x128xf32>
    tpu.vector_store %arg7[%c16_15, %c0_16], %14 {strides = array<i32>} : memref<40x128xf32, #tpu.memory_space<vmem>>, vector<4x128xf32>,
    %c0_17 = arith.constant 0 : index
    %c33 = arith.constant 33 : index
    %16 = vector.load %arg6[%c0_17, %c33] : memref<4x256xf32, #tpu.memory_space<vmem>>, vector<4x128xf32>
    %c20 = arith.constant 20 : index
    %c0_18 = arith.constant 0 : index
    %17 = vector.load %arg7[%c20, %c0_18] : memref<40x128xf32, #tpu.memory_space<vmem>>, vector<4x128xf32>
    tpu.vector_store %arg7[%c20, %c0_18], %16 {strides = array<i32>} : memref<40x128xf32, #tpu.memory_space<vmem>>, vector<4x128xf32>,
    %c0_19 = arith.constant 0 : index
    %c48 = arith.constant 48 : index
    %18 = vector.load %arg6[%c0_19, %c48] : memref<4x256xf32, #tpu.memory_space<vmem>>, vector<4x128xf32>
    %c24 = arith.constant 24 : index
    %c0_20 = arith.constant 0 : index
    %19 = vector.load %arg7[%c24, %c0_20] : memref<40x128xf32, #tpu.memory_space<vmem>>, vector<4x128xf32>
    tpu.vector_store %arg7[%c24, %c0_20], %18 {strides = array<i32>} : memref<40x128xf32, #tpu.memory_space<vmem>>, vector<4x128xf32>,
    %c0_21 = arith.constant 0 : index
    %c49 = arith.constant 49 : index
    %20 = vector.load %arg6[%c0_21, %c49] : memref<4x256xf32, #tpu.memory_space<vmem>>, vector<4x128xf32>
    %c28 = arith.constant 28 : index
    %c0_22 = arith.constant 0 : index
    %21 = vector.load %arg7[%c28, %c0_22] : memref<40x128xf32, #tpu.memory_space<vmem>>, vector<4x128xf32>
    tpu.vector_store %arg7[%c28, %c0_22], %20 {strides = array<i32>} : memref<40x128xf32, #tpu.memory_space<vmem>>, vector<4x128xf32>,
    %c0_23 = arith.constant 0 : index
    %c64_24 = arith.constant 64 : index
    %22 = vector.load %arg6[%c0_23, %c64_24] : memref<4x256xf32, #tpu.memory_space<vmem>>, vector<4x128xf32>
    %c32_25 = arith.constant 32 : index
    %c0_26 = arith.constant 0 : index
    %23 = vector.load %arg7[%c32_25, %c0_26] : memref<40x128xf32, #tpu.memory_space<vmem>>, vector<4x128xf32>
    tpu.vector_store %arg7[%c32_25, %c0_26], %22 {strides = array<i32>} : memref<40x128xf32, #tpu.memory_space<vmem>>, vector<4x128xf32>,
    %c0_27 = arith.constant 0 : index
    %c65 = arith.constant 65 : index
    %24 = vector.load %arg6[%c0_27, %c65] : memref<4x256xf32, #tpu.memory_space<vmem>>, vector<4x128xf32>
    %c36 = arith.constant 36 : index
    %c0_28 = arith.constant 0 : index
    %25 = vector.load %arg7[%c36, %c0_28] : memref<40x128xf32, #tpu.memory_space<vmem>>, vector<4x128xf32>
    tpu.vector_store %arg7[%c36, %c0_28], %24 {strides = array<i32>} : memref<40x128xf32, #tpu.memory_space<vmem>>, vector<4x128xf32>,
    %c0_29 = arith.constant 0 : index
    %c0_30 = arith.constant 0 : index
    %26 = vector.load %arg3[%c0_29, %c0_30] : memref<6x40xf32, #tpu.memory_space<vmem>>, vector<6x40xf32>
    %c0_31 = arith.constant 0 : index
    %c0_32 = arith.constant 0 : index
    %27 = vector.load %arg7[%c0_31, %c0_32] : memref<40x128xf32, #tpu.memory_space<vmem>>, vector<40x128xf32>
    %cst = arith.constant dense<0.000000e+00> : vector<6x128xf32>
    %28 = tpu.matmul %26, %27, %cst {dimension_numbers = #tpu.dot_dimension_numbers<[1], [0], [0], [1], [0, 0, 1, 1], [], []>} : vector<6x40xf32>, vector<40x128xf32>, vector<6x128xf32> -> vector<6x128xf32>
    %c0_33 = arith.constant 0 : index
    %c0_34 = arith.constant 0 : index
    %29 = vector.load %arg4[%c0_33, %c0_34] : memref<6x1xf32, #tpu.memory_space<vmem>>, vector<6x1xf32>
    %30 = vector.broadcast %29 : vector<6x1xf32> to vector<6x128xf32>
    %31 = arith.addf %28, %30 : vector<6x128xf32>
    %32 = tpu.iota {dimensions = array<i32: 1>} : vector<6x128xi32>
    %c16_i32 = arith.constant 16 : i32
    %c0_i32_35 = arith.constant 0 : i32
    %33 = arith.cmpi eq, %c16_i32, %c0_i32_35 : i32
    %c1_i32 = arith.constant 1 : i32
    %34 = arith.select %33, %c1_i32, %c16_i32 : i32
    %35 = vector.broadcast %34 : i32 to vector<6x128xi32>
    %36 = arith.remsi %32, %35 : vector<6x128xi32>
    %c0_i32_36 = arith.constant 0 : i32
    %37 = vector.broadcast %c0_i32_36 : i32 to vector<6x128xi32>
    %38 = arith.cmpi ne, %36, %37 : vector<6x128xi32>
    %c0_i32_37 = arith.constant 0 : i32
    %39 = vector.broadcast %c0_i32_37 : i32 to vector<6x128xi32>
    %40 = arith.cmpi slt, %36, %39 : vector<6x128xi32>
    %c0_i32_38 = arith.constant 0 : i32
    %41 = arith.cmpi slt, %34, %c0_i32_38 : i32
    %42 = vector.broadcast %41 : i1 to vector<6x128xi1>
    %43 = vector.broadcast %42 : vector<6x128xi1> to vector<6x128xi1>
    %44 = arith.xori %40, %43 : vector<6x128xi1>
    %45 = arith.andi %44, %38 : vector<6x128xi1>
    %46 = vector.broadcast %34 : i32 to vector<6x128xi32>
    %47 = arith.addi %36, %46 : vector<6x128xi32>
    %48 = arith.select %45, %47, %36 : vector<6x128xi1>, vector<6x128xi32>
    %c15_i32 = arith.constant 15 : i32
    %49 = vector.broadcast %c15_i32 : i32 to vector<6x128xi32>
    %50 = arith.cmpi slt, %48, %49 : vector<6x128xi32>
    %cst_39 = arith.constant 0.000000e+00 : f32
    %51 = vector.broadcast %cst_39 : f32 to vector<6x128xf32>
    %52 = arith.select %50, %31, %51 : vector<6x128xi1>, vector<6x128xf32>
    %c0_40 = arith.constant 0 : index
    %c0_41 = arith.constant 0 : index
    %c0_42 = arith.constant 0 : index
    %53 = vector.load %arg5[%c0_40, %c0_41, %c0_42] : memref<1x6x128xf32, #tpu.memory_space<vmem>>, vector<1x6x128xf32>
    %54 = vector.shape_cast %53 : vector<1x6x128xf32> to vector<6x128xf32>
    %55 = vector.shape_cast %52 : vector<6x128xf32> to vector<1x6x128xf32>
    tpu.vector_store %arg5[%c0_40, %c0_41, %c0_42], %55 {strides = array<i32>} : memref<1x6x128xf32, #tpu.memory_space<vmem>>, vector<1x6x128xf32>,
    %56 = vector.extract_strided_slice %1 {offsets = [0, 64], sizes = [4, 64], strides = [1, 1]} : vector<4x128xf32> to vector<4x64xf32>
    %c0_43 = arith.constant 0 : index
    %c0_44 = arith.constant 0 : index
    %57 = vector.load %arg6[%c0_43, %c0_44] : memref<4x256xf32, #tpu.memory_space<vmem>>, vector<4x64xf32>
    tpu.vector_store %arg6[%c0_43, %c0_44], %56 {strides = array<i32>} : memref<4x256xf32, #tpu.memory_space<vmem>>, vector<4x64xf32>,
    return
  }
  func.func @transform_0(%arg0: i32, %arg1: i32) -> (i32, i32, i32) {
    %c0_i32 = arith.constant 0 : i32
    %c0_i32_0 = arith.constant 0 : i32
    return %arg0, %c0_i32, %arg1 : i32, i32, i32
  }
  func.func @transform_1(%arg0: i32, %arg1: i32) -> (i32, i32) {
    %c0_i32 = arith.constant 0 : i32
    %c0_i32_0 = arith.constant 0 : i32
    %c0_i32_1 = arith.constant 0 : i32
    return %c0_i32, %c0_i32_0 : i32, i32
  }
  func.func @transform_2(%arg0: i32, %arg1: i32) -> (i32, i32) {
    %c0_i32 = arith.constant 0 : i32
    %c0_i32_0 = arith.constant 0 : i32
    %c0_i32_1 = arith.constant 0 : i32
    return %c0_i32, %c0_i32_0 : i32, i32
  }
  func.func @transform_3(%arg0: i32, %arg1: i32) -> (i32, i32, i32) {
    %c0_i32 = arith.constant 0 : i32
    %c0_i32_0 = arith.constant 0 : i32
    return %arg0, %c0_i32, %arg1 : i32, i32, i32
  }
}

</mosaic_0001>

<llo_original>
// kernel: tpu_custom_call.1
$region0: #{tpu_custom_call.1}
  #allocation0 [shape = 'u32[]', space=smem, size = 0x4, offset = 0x4, fixed_abs, tag = 'smem constant byte address 0x4 - core index']
  #allocation1 [shape = 'u32[144,128]{1,0:T(1,128)}', space=vmem, size = 0x12000, scoped, tag = 'internal scratch']
  #allocation2 [shape = 'f32[4,256]{1,0:T(4,128)}', space=vmem, size = 0x1000, scoped, tag = 'scratch operand']
  #allocation3 [shape = 'f32[40,128]{1,0:T(8,128)}', space=vmem, size = 0x5000, scoped, tag = 'scratch operand']
  %s0 = inlined_call_operand.hbm [shape: f32[2,4,256], index: 0, kind: input, shape index: {}]
  %s1 = inlined_call_operand.vmem [shape: f32[6,40], index: 1, kind: input, shape index: {}]
  %s2 = inlined_call_operand.vmem [shape: f32[6,1], index: 2, kind: input, shape index: {}]
  %s3 = inlined_call_operand.vmem [shape: f32[2,6,256], index: 3, kind: output, shape index: {}]
  %s4 = sld [smem:[#allocation0]]
  $region53: #{tpu_custom_call.1} parent=0
    _
  %s6 = ssub.s32 1, %s4
  %s7 = scalar_select 0, %s6, %s4
  $region1: #{tpu_custom_call.1} parent=0
    #allocation4 [shape = 'u8[4096]{0}', space=vmem, size = 0x1000, scoped, tag = 'input window, operand 0']
    #allocation5 [shape = 's32[2]{0}', space=sflag, size = 0x8, scoped, tag = 'scoped memory for tpu_custom_call.1']
    %8 = vsyncpa [#allocation5], 0
    %s9 = scalar_lea.sflag [#allocation5], 1
    %10 = vsyncpa %s9, 0
    loop: start=0, step=1, limit=6
    $region2: #{tpu_custom_call.1} parent=1 // loop_pre_header
      _
    $region3: #{tpu_custom_call.1} parent=1 // loop_header
      %s12 = sphi 0, %s16
      %p13 = scmp.ge.s32.totalorder %s12, 6
      %s19 = sphi 0, %s31
      %s20 = sphi 0, %s27
      %s21 = sphi 0, %s19
      %s22 = sphi 0, %s20
      %s23 = sphi 0, %s21
      %s24 = sphi 0, %s22
      %s36 = sphi 0, %s38
      %s39 = sphi 0, %s36
      %s40 = sphi 0, %s39
      %s56 = sphi 0, %s40
      %s60 = sphi 0, %s60
      %s62 = sphi 0, %s60
      %s63 = sphi 0, %s62
      %s77 = sphi 0, %s63
      %s81 = sphi 0, %s81
      %s83 = sphi 0, %s81
      %s84 = sphi 0, %s83
      %s98 = sphi 0, %s84
      %s106 = sphi 0, %s108
      %s109 = sphi 0, %s106
      %s110 = sphi 0, %s109
      %s126 = sphi 0, %s110
    $region4: #{tpu_custom_call.1} parent=1 // loop_header_branch
      %15 = sbr.rel (%p13) target = $region8
    $region5: #{tpu_custom_call.1} parent=1 // loop_body
      %s17 = ssub.s32 %s12, 1
      %s18 = ssub.s32 %s12, 2
      %s25 = sadd.s32 1, %s20
      %p26 = scmp.ge.s32.totalorder %s25, 2
      %s27 = scalar_select %p26, 0, %s25
      %s28 = sadd.s32 1, %s19
      %s29 = scalar_select %p26, %s28, %s19
      %p30 = scmp.ge.s32.totalorder %s29, 2
      %s31 = scalar_select %p30, 0, %s29
      %s32 = ssub.s32 %s19, %s31
      %s33 = ssub.s32 %s20, %s27
      %s34 = sor.u32 %s32, %s33
      %p35 = scmp.eq.s32.totalorder %s34, 0
      %s37 = sadd.s32 %s36, 1
      %s38 = scalar_select %p35, %s36, %s37
      %p41 = pneg %p35
      %p42 = scmp.eq.s32.totalorder %s12, 3
      %p43 = por %p41, %p42
      %p44 = scmp.ne.s32.totalorder %s36, %s39
      %p45 = scmp.eq.s32.totalorder %s12, 0
      %p46 = por %p44, %p45
      %p47 = scmp.ne.s32.totalorder %s36, %s39
      %p48 = scmp.eq.s32.totalorder %s17, 3
      %p49 = por %p47, %p48
      %p50 = scmp.ne.s32.totalorder %s39, %s40
      %p51 = scmp.eq.s32.totalorder %s17, 0
      %p52 = por %p50, %p51
      %p53 = scmp.ne.s32.totalorder %s39, %s40
      %p54 = scmp.eq.s32.totalorder %s18, 3
      %p55 = por %p53, %p54
      %p57 = scmp.ne.s32.totalorder %s40, %s56
      %p58 = scmp.eq.s32.totalorder %s18, 0
      %p59 = por %p57, %p58
      %s61 = sadd.s32 %s60, 1
      %p64 = scmp.eq.s32.totalorder %s12, 3
      %p65 = scmp.ne.s32.totalorder %s60, %s62
      %p66 = scmp.eq.s32.totalorder %s12, 0
      %p67 = por %p65, %p66
      %p68 = scmp.ne.s32.totalorder %s60, %s62
      %p69 = scmp.eq.s32.totalorder %s17, 3
      %p70 = por %p68, %p69
      %p71 = scmp.ne.s32.totalorder %s62, %s63
      %p72 = scmp.eq.s32.totalorder %s17, 0
      %p73 = por %p71, %p72
      %p74 = scmp.ne.s32.totalorder %s62, %s63
      %p75 = scmp.eq.s32.totalorder %s18, 3
      %p76 = por %p74, %p75
      %p78 = scmp.ne.s32.totalorder %s63, %s77
      %p79 = scmp.eq.s32.totalorder %s18, 0
      %p80 = por %p78, %p79
      %s82 = sadd.s32 %s81, 1
      %p85 = scmp.eq.s32.totalorder %s12, 3
      %p86 = scmp.ne.s32.totalorder %s81, %s83
      %p87 = scmp.eq.s32.totalorder %s12, 0
      %p88 = por %p86, %p87
      %p89 = scmp.ne.s32.totalorder %s81, %s83
      %p90 = scmp.eq.s32.totalorder %s17, 3
      %p91 = por %p89, %p90
      %p92 = scmp.ne.s32.totalorder %s83, %s84
      %p93 = scmp.eq.s32.totalorder %s17, 0
      %p94 = por %p92, %p93
      %p95 = scmp.ne.s32.totalorder %s83, %s84
      %p96 = scmp.eq.s32.totalorder %s18, 3
      %p97 = por %p95, %p96
      %p99 = scmp.ne.s32.totalorder %s84, %s98
      %p100 = scmp.eq.s32.totalorder %s18, 0
      %p101 = por %p99, %p100
      %s102 = ssub.s32 %s19, %s31
      %s103 = ssub.s32 %s20, %s27
      %s104 = sor.u32 %s102, %s103
      %p105 = scmp.eq.s32.totalorder %s104, 0
      %s107 = sadd.s32 %s106, 1
      %s108 = scalar_select %p105, %s106, %s107
      %p111 = pneg %p105
      %p112 = scmp.eq.s32.totalorder %s12, 3
      %p113 = por %p111, %p112
      %p114 = scmp.ne.s32.totalorder %s106, %s109
      %p115 = scmp.eq.s32.totalorder %s12, 0
      %p116 = por %p114, %p115
      %p117 = scmp.ne.s32.totalorder %s106, %s109
      %p118 = scmp.eq.s32.totalorder %s17, 3
      %p119 = por %p117, %p118
      %p120 = scmp.ne.s32.totalorder %s109, %s110
      %p121 = scmp.eq.s32.totalorder %s17, 0
      %p122 = por %p120, %p121
      %p123 = scmp.ne.s32.totalorder %s109, %s110
      %p124 = scmp.eq.s32.totalorder %s18, 3
      %p125 = por %p123, %p124
      %p127 = scmp.ne.s32.totalorder %s110, %s126
      %p128 = scmp.eq.s32.totalorder %s18, 0
      %p129 = por %p127, %p128
      %p130 = scmp.le.s32.totalorder 1, %s12
      %p131 = scmp.lt.s32.totalorder %s12, 5
      %p132 = pnand %p130, %p131
      %p133 = pneg %p132
      // Predicated region
      $region9: #{tpu_custom_call.1} parent=5 // pred_check
        _
      $region10: #{tpu_custom_call.1} parent=5 // pred_check_branch
        %135 = sbr.rel (%p132) target = $region12
      $region11: #{tpu_custom_call.1} parent=5 // pred_region
        %s136 = ssub.s32 %s12, 1
        // Predicated region
        $region13: #{tpu_custom_call.1} parent=11 // pred_check
          %p137 = pneg %p73
        $region14: #{tpu_custom_call.1} parent=11 // pred_check_branch
          %139 = sbr.rel (%p137) target = $region16
        $region15: #{tpu_custom_call.1} parent=11 // pred_region
          _
        $region16: #{tpu_custom_call.1} parent=11 // pred_fallthru
          _
        // Predicated region
        $region17: #{tpu_custom_call.1} parent=11 // pred_check
          %p140 = pneg %p94
        $region18: #{tpu_custom_call.1} parent=11 // pred_check_branch
          %142 = sbr.rel (%p140) target = $region20
        $region19: #{tpu_custom_call.1} parent=11 // pred_region
          _
        $region20: #{tpu_custom_call.1} parent=11 // pred_fallthru
          _
      $region12: #{tpu_custom_call.1} parent=5 // pred_fallthru
        _
      %p143 = scmp.lt.s32.totalorder %s12, 4
      // Predicated region
      $region21: #{tpu_custom_call.1} parent=5 // pred_check
        %p144 = pneg %p143
      $region22: #{tpu_custom_call.1} parent=5 // pred_check_branch
        %146 = sbr.rel (%p144) target = $region24
      $region23: #{tpu_custom_call.1} parent=5 // pred_region
        // Predicated region
        $region25: #{tpu_custom_call.1} parent=23 // pred_check
          %p147 = pneg %p46
        $region26: #{tpu_custom_call.1} parent=23 // pred_check_branch
          %149 = sbr.rel (%p147) target = $region28
        $region27: #{tpu_custom_call.1} parent=23 // pred_region
          %s150 = sand.u32 %s36, 1
          %s151 = scalar_lea.sflag [#allocation5], %s150
          %s152 = sand.u32 %s36, 1
          %s153 = smul.addr %s152, 4
          %s154 = scalar_lea.vmem [#allocation4], %s153
          %s156 = ssub.s32 64, 64
          %157 = vsyncadd %s151, %s156
          %s158 = smul.addr %s19, 2
          %s159 = sadd.s32 %s20, %s158
          %s160 = smul.addr %s159, 64
          %s161 = scalar_lea.hbm %s0, %s160
          %s163 = sshll.u32 %s154, 4
          %s164 = int_to_ptr.vmem [resolvable:$true] %s163
          %166 = dma.hbm_to_vmem [thread:$0]  %s161, 64, %s164, %s151
        $region28: #{tpu_custom_call.1} parent=23 // pred_fallthru
          _
      $region24: #{tpu_custom_call.1} parent=5 // pred_fallthru
        _
      %p167 = scmp.le.s32.totalorder 1, %s12
      %p168 = scmp.lt.s32.totalorder %s12, 5
      %p169 = pnand %p167, %p168
      %p170 = pneg %p169
      // Predicated region
      $region29: #{tpu_custom_call.1} parent=5 // pred_check
        _
      $region30: #{tpu_custom_call.1} parent=5 // pred_check_branch
        %172 = sbr.rel (%p169) target = $region32
      $region31: #{tpu_custom_call.1} parent=5 // pred_region
        %s173 = ssub.s32 %s12, 1
        %s174 = sand.u32 %s39, 1
        %s175 = scalar_lea.sflag [#allocation5], %s174
        %s176 = sand.u32 %s39, 1
        %s177 = smul.addr %s176, 4
        %s178 = scalar_lea.vmem [#allocation4], %s177
        // Predicated region
        $region33: #{tpu_custom_call.1} parent=31 // pred_check
          %p179 = pneg %p52
        $region34: #{tpu_custom_call.1} parent=31 // pred_check_branch
          %181 = sbr.rel (%p179) target = $region36
        $region35: #{tpu_custom_call.1} parent=31 // pred_region
          %182 = dma.done %s175, 64
        $region36: #{tpu_custom_call.1} parent=31 // pred_fallthru
          _
        %s183 = sand.u32 %s39, 1
        %s184 = scalar_lea.sflag [#allocation5], %s183
        %s185 = sand.u32 %s39, 1
        %s186 = smul.addr %s185, 4
        %s187 = scalar_lea.vmem [#allocation4], %s186
        %p188 = pneg %p52
        %p189 = pneg %p49
        %p190 = pneg %p73
        %p191 = pneg %p70
        %p192 = pneg %p94
        %p193 = pneg %p91
        %p194 = pneg %p122
        %p195 = pneg %p119
        %p196 = scmp.lt.s32.totalorder %s21, 1
        %s197 = scalar_select %p196, %s21, 1
        %p198 = scmp.lt.s32.totalorder %s22, 1
        %s199 = scalar_select %p198, %s22, 1
        %s200 = smul.addr %s197, 2
        %s201 = sadd.s32 %s199, %s200
        %s202 = smul.addr %s201, 8
        %s203 = scalar_lea.vmem %s3, %s202
        %p204 = scmp.lt.s32.totalorder %s21, 1
        %s205 = scalar_select %p204, %s21, 1
        %p206 = scmp.lt.s32.totalorder %s22, 1
        %s207 = scalar_select %p206, %s22, 1
        %s208 = smul.addr %s205, 2
        %s209 = sadd.s32 %s207, %s208
        %s210 = smul.addr %s209, 8
        %s211 = scalar_lea.vmem %s3, %s210
        %v212 = vld [vmem:[%s178] sm:$0xf]
        %p213 = scmp.eq.s32.totalorder %s22, 0
        // Predicated region
        $region37: #{tpu_custom_call.1} parent=31 // pred_check
          %p214 = pneg %p213
        $region38: #{tpu_custom_call.1} parent=31 // pred_check_branch
          %216 = sbr.rel (%p214) target = $region40
        $region39: #{tpu_custom_call.1} parent=31 // pred_region
          %217 = vst [vmem:[#allocation2] sm:$0xff] 0.0
        $region40: #{tpu_custom_call.1} parent=31 // pred_fallthru
          _
        %219 = vrot.lane.b32.xlu0 %v212, 64
        %v220 = vpop.permute.xlu0 %219
        %v221 = vrot.slane %v220, 4
        %vm222 = vcmask 523264
        %v223 = vsel %vm222, %v221, %v220
        %vm225 = vcmask 1043968
        %vm226 = vcmask 523268
        %vm227 = vmor %vm226, %vm225
        %228 = vst.msk [vmem:[#allocation2] sm:$0xff] %vm227, %v223
        %v229 = vld [vmem:[#allocation2] sm:$0xf]
        %230 = vst [vmem:[#allocation3] sm:$0xf] %v229
        %v231 = vld [vmem:[#allocation2] sm:$0xff]
        %v233 = vcombine.high %v231, %v231
        %234 = vrot.lane.b32.xlu0 %v231, 127
        %v235 = vpop.permute.xlu0 %234
        %236 = vrot.lane.b32.xlu0 %v233, 127
        %v237 = vpop.permute.xlu0 %236
        %vm238 = vcmask 1039360
        %v239 = vsel %vm238, %v235, %v237
        %241 = vst [vmem:[#allocation3 + $0x4] sm:$0xf] %v239
        %v242 = vld [vmem:[#allocation2] sm:$0xff]
        %v244 = vcombine.high %v242, %v242
        %245 = vrot.lane.b32.xlu0 %v242, 112
        %v246 = vpop.permute.xlu0 %245
        %247 = vrot.lane.b32.xlu0 %v244, 112
        %v248 = vpop.permute.xlu0 %247
        %vm249 = vcmask 916480
        %v250 = vsel %vm249, %v246, %v248
        %252 = vst [vmem:[#allocation3 + $0x8] sm:$0xf] %v250
        %v253 = vld [vmem:[#allocation2] sm:$0xff]
        %v255 = vcombine.high %v253, %v253
        %256 = vrot.lane.b32.xlu0 %v253, 111
        %v257 = vpop.permute.xlu0 %256
        %258 = vrot.lane.b32.xlu0 %v255, 111
        %v259 = vpop.permute.xlu0 %258
        %vm260 = vcmask 908288
        %v261 = vsel %vm260, %v257, %v259
        %263 = vst [vmem:[#allocation3 + $0xc] sm:$0xf] %v261
        %v264 = vld [vmem:[#allocation2] sm:$0xff]
        %v266 = vcombine.high %v264, %v264
        %267 = vrot.lane.b32.xlu0 %v264, 96
        %v268 = vpop.permute.xlu0 %267
        %269 = vrot.lane.b32.xlu0 %v266, 96
        %v270 = vpop.permute.xlu0 %269
        %vm271 = vcmask 785408
        %v272 = vsel %vm271, %v268, %v270
        %274 = vst [vmem:[#allocation3 + $0x10] sm:$0xf] %v272
        %v275 = vld [vmem:[#allocation2] sm:$0xff]
        %v277 = vcombine.high %v275, %v275
        %278 = vrot.lane.b32.xlu0 %v275, 95
        %v279 = vpop.permute.xlu0 %278
        %280 = vrot.lane.b32.xlu0 %v277, 95
        %v281 = vpop.permute.xlu0 %280
        %vm282 = vcmask 777216
        %v283 = vsel %vm282, %v279, %v281
        %285 = vst [vmem:[#allocation3 + $0x14] sm:$0xf] %v283
        %v286 = vld [vmem:[#allocation2] sm:$0xff]
        %v288 = vcombine.high %v286, %v286
        %289 = vrot.lane.b32.xlu0 %v286, 80
        %v290 = vpop.permute.xlu0 %289
        %291 = vrot.lane.b32.xlu0 %v288, 80
        %v292 = vpop.permute.xlu0 %291
        %vm293 = vcmask 654336
        %v294 = vsel %vm293, %v290, %v292
        %296 = vst [vmem:[#allocation3 + $0x18] sm:$0xf] %v294
        %v297 = vld [vmem:[#allocation2] sm:$0xff]
        %v299 = vcombine.high %v297, %v297
        %300 = vrot.lane.b32.xlu0 %v297, 79
        %v301 = vpop.permute.xlu0 %300
        %302 = vrot.lane.b32.xlu0 %v299, 79
        %v303 = vpop.permute.xlu0 %302
        %vm304 = vcmask 646144
        %v305 = vsel %vm304, %v301, %v303
        %307 = vst [vmem:[#allocation3 + $0x1c] sm:$0xf] %v305
        %v308 = vld [vmem:[#allocation2] sm:$0xff]
        %v310 = vcombine.high %v308, %v308
        %311 = vrot.lane.b32.xlu0 %v308, 64
        %v312 = vpop.permute.xlu0 %311
        %313 = vrot.lane.b32.xlu0 %v310, 64
        %v314 = vpop.permute.xlu0 %313
        %v315 = vsel %vm222, %v312, %v314
        %317 = vst [vmem:[#allocation3 + $0x20] sm:$0xf] %v315
        %v318 = vld [vmem:[#allocation2] sm:$0xff]
        %v320 = vcombine.high %v318, %v318
        %321 = vrot.lane.b32.xlu0 %v318, 63
        %v322 = vpop.permute.xlu0 %321
        %323 = vrot.lane.b32.xlu0 %v320, 63
        %v324 = vpop.permute.xlu0 %323
        %vm325 = vcmask 515072
        %v326 = vsel %vm325, %v322, %v324
        %328 = vst [vmem:[#allocation3 + $0x24] sm:$0xf] %v326
        %v329 = vld [vmem:[%s1] sm:$0x3f]
        %v330 = vld [vmem:[#allocation3] sm:$0xff]
        %v331 = vld [vmem:[#allocation3 + $0x8] sm:$0xff]
        %v332 = vld [vmem:[#allocation3 + $0x10] sm:$0xff]
        %v333 = vld [vmem:[#allocation3 + $0x18] sm:$0xff]
        %v334 = vld [vmem:[#allocation3 + $0x20] sm:$0xff]
        %v335 = vld [vmem:[%s2] sm:$0x3f]
        %337 = vset.pattern.permute.xlu0 0
        %338 = vperm.xlu0 %337, %v335
        %v339 = vpop.permute.xlu0 %338
        %vm341 = vcmask 326656
        %v343 = vsel %vm341, %v329, 0
        %345 = vmatprep.subr.mxu0 0.0
        %346 = vmatpush1.msra.mxu0 0.0
        %347 = vmatprep.subr.mxu0 0.0
        %348 = vmatpush1.msra.mxu0 0.0
        %349 = vmatprep.subr.mxu0 0.0
        %350 = vmatpush1.msra.mxu0 0.0
        %351 = vmatprep.subr.mxu0 0.0
        %352 = vmatpush1.msra.mxu0 0.0
        %353 = vmatprep.subr.mxu0 0.0
        %354 = vmatpush1.msra.mxu0 0.0
        %355 = vmatprep.subr.mxu0 0.0
        %356 = vmatpush1.msra.mxu0 0.0
        %357 = vmatprep.subr.mxu0 0.0
        %358 = vmatpush1.msra.mxu0 0.0
        %359 = vmatprep.subr.mxu0 0.0
        %360 = vmatpush1.msra.mxu0 0.0
        %361 = vmatprep.subr.mxu0 0.0
        %362 = vmatpush1.msra.mxu0 0.0
        %363 = vmatprep.subr.mxu0 0.0
        %364 = vmatpush1.msra.mxu0 0.0
        %365 = vmatprep.subr.mxu0 0.0
        %366 = vmatpush1.msra.mxu0 0.0
        %367 = vmatprep.subr.mxu0 0.0
        %368 = vmatpush1.msra.mxu0 %v334
        %369 = vmatprep.subr.mxu0 0.0
        %370 = vmatpush1.msra.mxu0 %v333
        %371 = vmatprep.subr.mxu0 0.0
        %372 = vmatpush1.msra.mxu0 %v332
        %373 = vmatprep.subr.mxu0 0.0
        %374 = vmatpush1.msra.mxu0 %v331
        %375 = vmatprep.subr.mxu0 0.0
        %376 = vmatpush1.msra.mxu0 %v330
        %377 = vmatprep.subr.mxu0 0.0
        %378 = vmatpush2.msra.mxu0 0.0
        %379 = vmatprep.subr.mxu0 0.0
        %380 = vmatpush2.msra.mxu0 0.0
        %381 = vmatprep.subr.mxu0 0.0
        %382 = vmatpush2.msra.mxu0 0.0
        %383 = vmatprep.subr.mxu0 0.0
        %384 = vmatpush2.msra.mxu0 0.0
        %385 = vmatprep.subr.mxu0 0.0
        %386 = vmatpush2.msra.mxu0 0.0
        %387 = vmatprep.subr.mxu0 0.0
        %388 = vmatpush2.msra.mxu0 0.0
        %389 = vmatprep.subr.mxu0 0.0
        %390 = vmatpush2.msra.mxu0 0.0
        %391 = vmatprep.subr.mxu0 0.0
        %392 = vmatpush2.msra.mxu0 0.0
        %393 = vmatprep.subr.mxu0 0.0
        %394 = vmatpush2.msra.mxu0 0.0
        %395 = vmatprep.subr.mxu0 0.0
        %396 = vmatpush2.msra.mxu0 0.0
        %397 = vmatprep.subr.mxu0 0.0
        %398 = vmatpush2.msra.mxu0 0.0
        %399 = vmatprep.subr.mxu0 0.0
        %400 = vmatpush2.msra.mxu0 0.0
        %401 = vmatprep.subr.mxu0 0.0
        %402 = vmatpush2.msra.mxu0 0.0
        %403 = vmatprep.subr.mxu0 0.0
        %404 = vmatpush2.msra.mxu0 0.0
        %405 = vmatprep.subr.mxu0 0.0
        %406 = vmatpush2.msra.mxu0 0.0
        %407 = vmatprep.subr.mxu0 0.0
        %408 = vmatpush2.msra.mxu0 0.0
        %409 = vmatprep.mubr.f32.mxu0 0.0
        %410 = vmatmul.mubr.f32.gmra.mxu0 %v343
        %v411 = vpop.f32.mrf.mxu0
        %v412 = vadd.f32 %v339, %v411
        %v413 = vpop.f32.mrf.mxu0
        %414 = vdwg.mxu0
        %v415 = vlaneseq
        %v416 = vand.u32 %v415, 127
        %vm417 = vcmp.lt.s32.totalorder %v416, 0
        %v418 = vsub.s32 0, %v416
        %v419 = vsel %vm417, %v418, %v416
        %v420 = vshrl.u32 %v419, 4
        %v421 = vand.u32 %v419, 15
        %v422 = vsub.s32 0, %v421
        %v423 = vsel %vm417, %v422, %v421
        %vm424 = vcmp.ne.s32.totalorder %v423, 0
        %vm425 = vcmp.lt.s32.totalorder %v423, 0
        %vm426 = vmand %vm425, %vm424
        %v427 = vadd.s32 %v423, 16
        %v428 = vsel %vm426, %v427, %v423
        %vm429 = vcmp.lt.s32.totalorder %v428, 15
        %v430 = vsel %vm429, %v412, 0.0
        %431 = vst [vmem:[%s211] sm:$0x3f] %v430
        %vm433 = vcmask 519168
        %434 = vst.msk [vmem:[#allocation2] sm:$0xf] %vm433, %v220
        %p435 = scmp.lt.s32.totalorder %s21, 1
        %s436 = scalar_select %p435, %s21, 1
        %p437 = scmp.lt.s32.totalorder %s22, 1
        %s438 = scalar_select %p437, %s22, 1
        %s439 = smul.addr %s436, 2
        %s440 = sadd.s32 %s438, %s439
        %s441 = smul.addr %s440, 8
        %s442 = scalar_lea.vmem %s3, %s441
        // Predicated region
        $region41: #{tpu_custom_call.1} parent=31 // pred_check
          %p443 = pneg %p119
        $region42: #{tpu_custom_call.1} parent=31 // pred_check_branch
          %445 = sbr.rel (%p443) target = $region44
        $region43: #{tpu_custom_call.1} parent=31 // pred_region
          _
        $region44: #{tpu_custom_call.1} parent=31 // pred_fallthru
          _
      $region32: #{tpu_custom_call.1} parent=5 // pred_fallthru
        _
      %p446 = scmp.le.s32.totalorder 2, %s12
      // Predicated region
      $region45: #{tpu_custom_call.1} parent=5 // pred_check
        %p447 = pneg %p446
      $region46: #{tpu_custom_call.1} parent=5 // pred_check_branch
        %449 = sbr.rel (%p447) target = $region48
      $region47: #{tpu_custom_call.1} parent=5 // pred_region
        %s450 = ssub.s32 %s12, 2
        // Predicated region
        $region49: #{tpu_custom_call.1} parent=47 // pred_check
          %p451 = pneg %p125
        $region50: #{tpu_custom_call.1} parent=47 // pred_check_branch
          %453 = sbr.rel (%p451) target = $region52
        $region51: #{tpu_custom_call.1} parent=47 // pred_region
          %p454 = scmp.lt.s32.totalorder %s23, 1
          %s455 = scalar_select %p454, %s23, 1
          %p456 = scmp.lt.s32.totalorder %s24, 1
          %s457 = scalar_select %p456, %s24, 1
          %s458 = smul.addr %s455, 2
          %s459 = sadd.s32 %s457, %s458
          %s460 = smul.addr %s459, 8
          %s461 = scalar_lea.vmem %s3, %s460
        $region52: #{tpu_custom_call.1} parent=47 // pred_fallthru
          _
      $region48: #{tpu_custom_call.1} parent=5 // pred_fallthru
        _
    $region6: #{tpu_custom_call.1} parent=1 // loop_footer
      %s16 = sadd.s32 1, %s12
    $region7: #{tpu_custom_call.1} parent=1 // loop_footer_branch
      %11 = sbr.rel target = $region3
    $region8: #{tpu_custom_call.1} parent=1 // loop_exit
      _
    %462 = vsyncpa [#allocation5], 1
    %s463 = scalar_lea.sflag [#allocation5], 1
    %464 = vsyncpa %s463, 1

</llo_original>
